<compile_context>
chip_gen: v6e
topology: v6e:2x2x1
jax: 0.10.0
libtpu: 0.0.40
codegen_flags: <defaults>
</compile_context>

<pallas_src>
import functools

import jax
import jax.numpy as jnp
from jax.experimental import pallas as pl
from jax.experimental.pallas import tpu as pltpu

MNIST_IMAGE_PIXELS = 28 * 28   # 784
MNIST_NUM_CLASSES = 10
H1 = 64
H2 = 30
PADDED_CLASSES = 128           # lane-dense output slab (last dim multiple of 128)


def _round_up(x, m):
    return (x + m - 1) // m * m


def _sigmoid(x):
    # exp goes to the EUP; approx reciprocal also lands on the EUP slot,
    # avoiding a per-element VPU divide.
    return pl.reciprocal(1.0 + jnp.exp(-x), approx=True)


def mlp_logits_kernel(x_ref, w1_ref, b1_ref, w2_ref, b2_ref, w3_ref, b3_ref, o_ref):
    """One batch tile: (TB, 784) bf16 -> (TB, 128) f32 logits (columns >= 10 are zero)."""
    x = x_ref[...]                                               # bf16 (TB, 784)

    # Layer 1: (TB, 784) @ (784, 64), f32 accumulate; bias + sigmoid in f32.
    h1 = jnp.dot(x, w1_ref[...], preferred_element_type=jnp.float32) + b1_ref[...]
    h1 = _sigmoid(h1)

    # Layer 2: (TB, 64) @ (64, 30); feed the MXU bf16, accumulate f32.
    h2 = jnp.dot(h1.astype(jnp.bfloat16), w2_ref[...],
                 preferred_element_type=jnp.float32) + b2_ref[...]
    h2 = _sigmoid(h2)

    # Layer 3 (padded to 128 output lanes): (TB, 30) @ (30, 128).
    logits = jnp.dot(h2.astype(jnp.bfloat16), w3_ref[...],
                     preferred_element_type=jnp.float32) + b3_ref[...]
    o_ref[...] = logits.astype(o_ref.dtype)


def softmax_dim0_kernel(z_ref, o_ref):
    """torch.nn.Softmax(dim=0): normalize each class column over the batch axis."""
    z = z_ref[...]                                               # f32 (B, 128)
    m = jnp.max(z, axis=0, keepdims=True)
    e = jnp.exp(z - m)
    s = jnp.sum(e, axis=0, keepdims=True)
    o_ref[...] = (e * pl.reciprocal(s, approx=True)).astype(o_ref.dtype)


@functools.partial(jax.jit, static_argnames=("block_b",))
def mnist_mlp_forward(x, w1, b1, w2, b2, w3, b3, *, block_b=512):
    """x: (B, 784) f32. Weights stored (in, out) (== PyTorch x @ W.T + b); biases (1, out).

    Returns softmax-over-batch probabilities of shape (B, 10).
    """
    B = x.shape[0]
    TB = min(block_b, _round_up(B, 8))        # sublane-aligned batch tile
    grid = (pl.cdiv(B, TB),)

    # HBM traffic is dominated by x (784 features/row): ship x + weight matrices as
    # bf16; keep biases, MXU accumulation and all elementwise math in f32.
    xb = x.astype(jnp.bfloat16)
    w1b = w1.astype(jnp.bfloat16)
    w2b = w2.astype(jnp.bfloat16)
    # Pad layer 3 to 128 output lanes so the logits store is lane-dense (unmasked vst);
    # padded columns get logit 0 and are sliced off after the softmax pass.
    w3p = jnp.zeros((H2, PADDED_CLASSES), jnp.bfloat16)
    w3p = w3p.at[:, :MNIST_NUM_CLASSES].set(w3.astype(jnp.bfloat16))
    b3p = jnp.zeros((1, PADDED_CLASSES), jnp.float32)
    b3p = b3p.at[:, :MNIST_NUM_CLASSES].set(b3)

    def resident(a):
        # Same block every grid step -> weights/biases are DMA'd once and stay in VMEM.
        return pl.BlockSpec(a.shape, lambda i: (0,) * a.ndim)

    logits = pl.pallas_call(
        mlp_logits_kernel,
        out_shape=jax.ShapeDtypeStruct((B, PADDED_CLASSES), jnp.float32),
        grid=grid,
        in_specs=[
            pl.BlockSpec((TB, MNIST_IMAGE_PIXELS), lambda i: (i, 0)),
            resident(w1b), resident(b1),
            resident(w2b), resident(b2),
            resident(w3p), resident(b3p),
        ],
        out_specs=pl.BlockSpec((TB, PADDED_CLASSES), lambda i: (i, 0)),
        compiler_params=pltpu.CompilerParams(
            # Batch tiles are independent (softmax is a separate pass) -> megacore
            # sharding on v7x; tile sizes (<=512 rows) fit default scoped VMEM on all gens.
            dimension_semantics=("parallel",),
        ),
    )(xb, w1b, b1, w2b, b2, w3p, b3p)

    # Softmax over dim=0 couples every batch row per class column, so it runs as a
    # second tiny pass over the full (B, 128) logits (512 bytes per row).
    probs = pl.pallas_call(
        softmax_dim0_kernel,
        out_shape=jax.ShapeDtypeStruct((B, PADDED_CLASSES), jnp.float32),
        grid=(),
        in_specs=[pl.BlockSpec((B, PADDED_CLASSES), lambda: (0, 0))],
        out_specs=pl.BlockSpec((B, PADDED_CLASSES), lambda: (0, 0)),
    )(logits)

    return probs[:, :MNIST_NUM_CLASSES]


def init_params(key):
    """PyTorch-style init: U(-1/sqrt(fan_in), 1/sqrt(fan_in)); weights stored (in, out)."""
    ks = jax.random.split(key, 6)

    def lin(kw, kb, fan_in, fan_out):
        bound = 1.0 / jnp.sqrt(jnp.float32(fan_in))
        w = jax.random.uniform(kw, (fan_in, fan_out), jnp.float32, -bound, bound)
        b = jax.random.uniform(kb, (1, fan_out), jnp.float32, -bound, bound)
        return w, b

    w1, b1 = lin(ks[0], ks[1], MNIST_IMAGE_PIXELS, H1)
    w2, b2 = lin(ks[2], ks[3], H1, H2)
    w3, b3 = lin(ks[4], ks[5], H2, MNIST_NUM_CLASSES)
    return w1, b1, w2, b2, w3, b3


if __name__ == "__main__":
    key = jax.random.PRNGKey(0)
    k_x, k_p = jax.random.split(key)

    B = 8  # small batch of flattened 28x28 MNIST images
    x = jax.random.uniform(k_x, (B, MNIST_IMAGE_PIXELS), jnp.float32)
    params = init_params(k_p)

    out = jax.block_until_ready(mnist_mlp_forward(x, *params))
    assert out.shape == (B, MNIST_NUM_CLASSES)

    # Reference in plain JAX with the same bf16 feeding of the matmuls.
    w1, b1, w2, b2, w3, b3 = params
    xb = x.astype(jnp.bfloat16)
    h1 = jax.nn.sigmoid(jnp.dot(xb, w1.astype(jnp.bfloat16),
                                preferred_element_type=jnp.float32) + b1)
    h2 = jax.nn.sigmoid(jnp.dot(h1.astype(jnp.bfloat16), w2.astype(jnp.bfloat16),
                                preferred_element_type=jnp.float32) + b2)
    logits = jnp.dot(h2.astype(jnp.bfloat16), w3.astype(jnp.bfloat16),
                     preferred_element_type=jnp.float32) + b3
    ref = jax.nn.softmax(logits, axis=0)   # Softmax(dim=0): normalize over the batch axis

    # bf16 MXU inputs + approx EUP reciprocals -> relaxed tolerance vs the f32 reference.
    err = float(jnp.max(jnp.abs(out - ref)))
    assert jnp.allclose(out, ref, atol=2e-2, rtol=2e-2), err
    # Each class column sums to 1 (softmax over the batch axis, as in the module).
    assert jnp.allclose(out.sum(axis=0), 1.0, atol=1e-2)

    print("KERNEL_OK")
</pallas_src>

<mosaic_0001>
module attributes {stable_mosaic.version = 11 : i64} {
  func.func @softmax_dim0_kernel(%arg0: memref<8x128xf32, #tpu.memory_space<vmem>>, %arg1: memref<8x128xf32, #tpu.memory_space<vmem>>) attributes {dimension_semantics = [], scalar_prefetch = 0 : i64, scratch_operands = 0 : i64, tpu.core_type = #tpu.core_type<tc>} {
    %c0 = arith.constant 0 : index
    %c0_0 = arith.constant 0 : index
    %0 = vector.load %arg0[%c0, %c0_0] : memref<8x128xf32, #tpu.memory_space<vmem>>, vector<8x128xf32>
    %cst = arith.constant dense<0xFF800000> : vector<128xf32>
    %1 = vector.multi_reduction <maximumf>, %0, %cst [0] : vector<8x128xf32> to vector<128xf32>
    %2 = vector.shape_cast %1 : vector<128xf32> to vector<1x128xf32>
    %3 = vector.broadcast %2 : vector<1x128xf32> to vector<8x128xf32>
    %4 = arith.subf %0, %3 : vector<8x128xf32>
    %5 = math.exp %4 : vector<8x128xf32>
    %cst_1 = arith.constant dense<0.000000e+00> : vector<128xf32>
    %6 = vector.multi_reduction <add>, %5, %cst_1 [0] : vector<8x128xf32> to vector<128xf32>
    %7 = vector.shape_cast %6 : vector<128xf32> to vector<1x128xf32>
    %8 = tpu.reciprocal %7 {approx = true} : vector<1x128xf32> -> vector<1x128xf32>
    %9 = vector.broadcast %8 : vector<1x128xf32> to vector<8x128xf32>
    %10 = arith.mulf %5, %9 : vector<8x128xf32>
    %c0_2 = arith.constant 0 : index
    %c0_3 = arith.constant 0 : index
    %11 = vector.load %arg1[%c0_2, %c0_3] : memref<8x128xf32, #tpu.memory_space<vmem>>, vector<8x128xf32>
    tpu.vector_store %arg1[%c0_2, %c0_3], %10 {strides = array<i32>} : memref<8x128xf32, #tpu.memory_space<vmem>>, vector<8x128xf32>,
    return
  }
}

module attributes {stable_mosaic.version = 11 : i64} {
  func.func @mlp_logits_kernel(%arg0: i32, %arg1: memref<8x784xbf16, #tpu.memory_space<vmem>>, %arg2: memref<784x64xbf16, #tpu.memory_space<vmem>>, %arg3: memref<1x64xf32, #tpu.memory_space<vmem>>, %arg4: memref<64x30xbf16, #tpu.memory_space<vmem>>, %arg5: memref<1x30xf32, #tpu.memory_space<vmem>>, %arg6: memref<30x128xbf16, #tpu.memory_space<vmem>>, %arg7: memref<1x128xf32, #tpu.memory_space<vmem>>, %arg8: memref<8x128xf32, #tpu.memory_space<vmem>>) attributes {dimension_semantics = [#tpu.dimension_semantics<parallel>], iteration_bounds = array<i64: 1>, scalar_prefetch = 0 : i64, scratch_operands = 0 : i64, tpu.core_type = #tpu.core_type<tc>, window_params = [{transform_indices = @transform_0, window_bounds = array<i64: 8, 784>}, {pipeline_mode = #tpu.pipeline_mode<synchronous>, transform_indices = @transform_1, window_bounds = array<i64: 784, 64>}, {pipeline_mode = #tpu.pipeline_mode<synchronous>, transform_indices = @transform_2, window_bounds = array<i64: 1, 64>}, {pipeline_mode = #tpu.pipeline_mode<synchronous>, transform_indices = @transform_3, window_bounds = array<i64: 64, 30>}, {pipeline_mode = #tpu.pipeline_mode<synchronous>, transform_indices = @transform_4, window_bounds = array<i64: 1, 30>}, {pipeline_mode = #tpu.pipeline_mode<synchronous>, transform_indices = @transform_5, window_bounds = array<i64: 30, 128>}, {pipeline_mode = #tpu.pipeline_mode<synchronous>, transform_indices = @transform_6, window_bounds = array<i64: 1, 128>}, {transform_indices = @transform_7, window_bounds = array<i64: 8, 128>}]} {
    %c0 = arith.constant 0 : index
    %c0_0 = arith.constant 0 : index
    %0 = vector.load %arg1[%c0, %c0_0] : memref<8x784xbf16, #tpu.memory_space<vmem>>, vector<8x784xbf16>
    %c0_1 = arith.constant 0 : index
    %c0_2 = arith.constant 0 : index
    %1 = vector.load %arg2[%c0_1, %c0_2] : memref<784x64xbf16, #tpu.memory_space<vmem>>, vector<784x64xbf16>
    %cst = arith.constant dense<0.000000e+00> : vector<8x64xf32>
    %2 = tpu.matmul %0, %1, %cst {dimension_numbers = #tpu.dot_dimension_numbers<[1], [0], [0], [1], [0, 0, 1, 1], [], []>} : vector<8x784xbf16>, vector<784x64xbf16>, vector<8x64xf32> -> vector<8x64xf32>
    %c0_3 = arith.constant 0 : index
    %c0_4 = arith.constant 0 : index
    %3 = vector.load %arg3[%c0_3, %c0_4] : memref<1x64xf32, #tpu.memory_space<vmem>>, vector<1x64xf32>
    %4 = vector.broadcast %3 : vector<1x64xf32> to vector<8x64xf32>
    %5 = arith.addf %2, %4 : vector<8x64xf32>
    %cst_5 = arith.constant 0.000000e+00 : f32
    %6 = vector.broadcast %cst_5 : f32 to vector<8x64xf32>
    %7 = arith.subf %6, %5 : vector<8x64xf32>
    %8 = math.exp %7 : vector<8x64xf32>
    %cst_6 = arith.constant 1.000000e+00 : f32
    %9 = vector.broadcast %cst_6 : f32 to vector<8x64xf32>
    %10 = arith.addf %9, %8 : vector<8x64xf32>
    %11 = tpu.reciprocal %10 {approx = true} : vector<8x64xf32> -> vector<8x64xf32>
    %12 = arith.truncf %11 : vector<8x64xf32> to vector<8x64xbf16>
    %c0_7 = arith.constant 0 : index
    %c0_8 = arith.constant 0 : index
    %13 = vector.load %arg4[%c0_7, %c0_8] : memref<64x30xbf16, #tpu.memory_space<vmem>>, vector<64x30xbf16>
    %cst_9 = arith.constant dense<0.000000e+00> : vector<8x30xf32>
    %14 = tpu.matmul %12, %13, %cst_9 {dimension_numbers = #tpu.dot_dimension_numbers<[1], [0], [0], [1], [0, 0, 1, 1], [], []>} : vector<8x64xbf16>, vector<64x30xbf16>, vector<8x30xf32> -> vector<8x30xf32>
    %c0_10 = arith.constant 0 : index
    %c0_11 = arith.constant 0 : index
    %15 = vector.load %arg5[%c0_10, %c0_11] : memref<1x30xf32, #tpu.memory_space<vmem>>, vector<1x30xf32>
    %16 = vector.broadcast %15 : vector<1x30xf32> to vector<8x30xf32>
    %17 = arith.addf %14, %16 : vector<8x30xf32>
    %cst_12 = arith.constant 0.000000e+00 : f32
    %18 = vector.broadcast %cst_12 : f32 to vector<8x30xf32>
    %19 = arith.subf %18, %17 : vector<8x30xf32>
    %20 = math.exp %19 : vector<8x30xf32>
    %cst_13 = arith.constant 1.000000e+00 : f32
    %21 = vector.broadcast %cst_13 : f32 to vector<8x30xf32>
    %22 = arith.addf %21, %20 : vector<8x30xf32>
    %23 = tpu.reciprocal %22 {approx = true} : vector<8x30xf32> -> vector<8x30xf32>
    %24 = arith.truncf %23 : vector<8x30xf32> to vector<8x30xbf16>
    %c0_14 = arith.constant 0 : index
    %c0_15 = arith.constant 0 : index
    %25 = vector.load %arg6[%c0_14, %c0_15] : memref<30x128xbf16, #tpu.memory_space<vmem>>, vector<30x128xbf16>
    %cst_16 = arith.constant dense<0.000000e+00> : vector<8x128xf32>
    %26 = tpu.matmul %24, %25, %cst_16 {dimension_numbers = #tpu.dot_dimension_numbers<[1], [0], [0], [1], [0, 0, 1, 1], [], []>} : vector<8x30xbf16>, vector<30x128xbf16>, vector<8x128xf32> -> vector<8x128xf32>
    %c0_17 = arith.constant 0 : index
    %c0_18 = arith.constant 0 : index
    %27 = vector.load %arg7[%c0_17, %c0_18] : memref<1x128xf32, #tpu.memory_space<vmem>>, vector<1x128xf32>
    %28 = vector.broadcast %27 : vector<1x128xf32> to vector<8x128xf32>
    %29 = arith.addf %26, %28 : vector<8x128xf32>
    %c0_19 = arith.constant 0 : index
    %c0_20 = arith.constant 0 : index
    %30 = vector.load %arg8[%c0_19, %c0_20] : memref<8x128xf32, #tpu.memory_space<vmem>>, vector<8x128xf32>
    tpu.vector_store %arg8[%c0_19, %c0_20], %29 {strides = array<i32>} : memref<8x128xf32, #tpu.memory_space<vmem>>, vector<8x128xf32>,
    return
  }
  func.func @transform_0(%arg0: i32) -> (i32, i32) {
    %c0_i32 = arith.constant 0 : i32
    %c0_i32_0 = arith.constant 0 : i32
    return %arg0, %c0_i32 : i32, i32
  }
  func.func @transform_1(%arg0: i32) -> (i32, i32) {
    %c0_i32 = arith.constant 0 : i32
    %c0_i32_0 = arith.constant 0 : i32
    %c0_i32_1 = arith.constant 0 : i32
    return %c0_i32, %c0_i32_0 : i32, i32
  }
  func.func @transform_2(%arg0: i32) -> (i32, i32) {
    %c0_i32 = arith.constant 0 : i32
    %c0_i32_0 = arith.constant 0 : i32
    %c0_i32_1 = arith.constant 0 : i32
    return %c0_i32, %c0_i32_0 : i32, i32
  }
  func.func @transform_3(%arg0: i32) -> (i32, i32) {
    %c0_i32 = arith.constant 0 : i32
    %c0_i32_0 = arith.constant 0 : i32
    %c0_i32_1 = arith.constant 0 : i32
    return %c0_i32, %c0_i32_0 : i32, i32
  }
  func.func @transform_4(%arg0: i32) -> (i32, i32) {
    %c0_i32 = arith.constant 0 : i32
    %c0_i32_0 = arith.constant 0 : i32
    %c0_i32_1 = arith.constant 0 : i32
    return %c0_i32, %c0_i32_0 : i32, i32
  }
  func.func @transform_5(%arg0: i32) -> (i32, i32) {
    %c0_i32 = arith.constant 0 : i32
    %c0_i32_0 = arith.constant 0 : i32
    %c0_i32_1 = arith.constant 0 : i32
    return %c0_i32, %c0_i32_0 : i32, i32
  }
  func.func @transform_6(%arg0: i32) -> (i32, i32) {
    %c0_i32 = arith.constant 0 : i32
    %c0_i32_0 = arith.constant 0 : i32
    %c0_i32_1 = arith.constant 0 : i32
    return %c0_i32, %c0_i32_0 : i32, i32
  }
  func.func @transform_7(%arg0: i32) -> (i32, i32) {
    %c0_i32 = arith.constant 0 : i32
    %c0_i32_0 = arith.constant 0 : i32
    return %arg0, %c0_i32 : i32, i32
  }
}

</mosaic_0001>

<llo_original>
// kernel: mnist_mlp_forward.3
$region0: #{mnist_mlp_forward.3}
  #allocation0 [shape = 'u32[]', space=smem, size = 0x4, offset = 0x4, fixed_abs, tag = 'smem constant byte address 0x4 - core index']
  #allocation1 [shape = 'u32[144,128]{1,0:T(1,128)}', space=vmem, size = 0x12000, scoped, tag = 'internal scratch']
  %s0 = inlined_call_operand.vmem [shape: f32[8,128], index: 0, kind: input, shape index: {}]
  %s1 = inlined_call_operand.hbm [shape: f32[8,128], index: 1, kind: output, shape index: {}]
  %s2 = sld [smem:[#allocation0]]
  $region14: #{mnist_mlp_forward.3} parent=0
    _
  %s4 = ssub.s32 1, %s2
  %s5 = scalar_select 0, %s4, %s2
  $region1: #{mnist_mlp_forward.3} parent=0
    #allocation2 [shape = 'u8[4096]{0}', space=vmem, size = 0x1000, scoped, tag = 'output window, operand 0, single buffered']
    #allocation3 [shape = 's32[1]{0}', space=sflag, size = 0x4, scoped, tag = 'scoped memory for mnist_mlp_forward.3']
    %6 = vsyncpa [#allocation3], 0
    // Predicated region
    $region2: #{mnist_mlp_forward.3} parent=1 // pred_check
      _
    $region3: #{mnist_mlp_forward.3} parent=1 // pred_check_branch
      %8 = sbr.rel (0) target = $region5
    $region4: #{mnist_mlp_forward.3} parent=1 // pred_region
      _
    $region5: #{mnist_mlp_forward.3} parent=1 // pred_fallthru
      _
    %v9 = vld [vmem:[%s0] sm:$0xff]
    %v10 = vrot.slane %v9, 4
    %v11 = vmax.f32 %v9, %v10
    %v12 = vrot.slane %v11, 2
    %v13 = vmax.f32 %v11, %v12
    %v14 = vrot.slane %v13, 1
    %v15 = vmax.f32 %v13, %v14
    %v16 = vsub.f32 %v9, %v15
    %v17 = vmul.f32 %v16, 1.442695
    %v18 = vpow.pop %v17
    %v19 = vrot.slane %v18, 4
    %v20 = vadd.f32 %v18, %v19
    %v21 = vrot.slane %v20, 2
    %v22 = vadd.f32 %v20, %v21
    %v23 = vrot.slane %v22, 1
    %v24 = vadd.f32 %v22, %v23
    %v25 = vrcp.pop %v24
    %v26 = vmul.f32 %v18, %v25
    %27 = vst [vmem:[#allocation2] sm:$0xff] %v26
    // Predicated region
    $region6: #{mnist_mlp_forward.3} parent=1 // pred_check
      _
    $region7: #{mnist_mlp_forward.3} parent=1 // pred_check_branch
      %29 = sbr.rel (0) target = $region9
    $region8: #{mnist_mlp_forward.3} parent=1 // pred_region
      %s31 = ssub.s32 128, 128
      %32 = vsyncadd [#allocation3], %s31
      %s34 = sshll.u32 [#allocation2], 4
      %s35 = int_to_ptr.vmem [resolvable:$true] %s34
      %37 = dma.vmem_to_hbm [thread:$0]  %s35, 128, %s1, [#allocation3]
    $region9: #{mnist_mlp_forward.3} parent=1 // pred_fallthru
      _
    // Predicated region
    $region10: #{mnist_mlp_forward.3} parent=1 // pred_check
      _
    $region11: #{mnist_mlp_forward.3} parent=1 // pred_check_branch
      %39 = sbr.rel (0) target = $region13
    $region12: #{mnist_mlp_forward.3} parent=1 // pred_region
      %40 = dma.done [#allocation3], 128
    $region13: #{mnist_mlp_forward.3} parent=1 // pred_fallthru
      _
    %41 = vsyncpa [#allocation3], 1

// kernel: mnist_mlp_forward.2
$region0: #{mnist_mlp_forward.2}
  #allocation0 [shape = 'u32[]', space=smem, size = 0x4, offset = 0x4, fixed_abs, tag = 'smem constant byte address 0x4 - core index']
  #allocation1 [shape = 'u32[144,128]{1,0:T(1,128)}', space=vmem, size = 0x12000, scoped, tag = 'internal scratch']
  %s0 = inlined_call_operand.vmem [shape: bf16[8,784], index: 0, kind: input, shape index: {}]
  %s1 = inlined_call_operand.vmem [shape: bf16[784,64], index: 1, kind: input, shape index: {}]
  %s2 = inlined_call_operand.vmem [shape: f32[1,64], index: 2, kind: input, shape index: {}]
  %s3 = inlined_call_operand.vmem [shape: bf16[64,30], index: 3, kind: input, shape index: {}]
  %s4 = inlined_call_operand.vmem [shape: f32[1,30], index: 4, kind: input, shape index: {}]
  %s5 = inlined_call_operand.vmem [shape: bf16[30,128], index: 5, kind: input, shape index: {}]
  %s6 = inlined_call_operand.vmem [shape: f32[1,128], index: 6, kind: input, shape index: {}]
  %s7 = inlined_call_operand.vmem [shape: f32[8,128], index: 7, kind: output, shape index: {}]
  %s8 = sld [smem:[#allocation0]]
  $region38: #{mnist_mlp_forward.2} parent=0
    _
  %s10 = ssub.s32 1, %s8
  %s11 = scalar_select 0, %s10, %s8
  // Predicated region
  $region2: #{mnist_mlp_forward.2} parent=0 // pred_check
    _
  $region3: #{mnist_mlp_forward.2} parent=0 // pred_check_branch
    %13 = sbr.rel (0) target = $region5
  $region4: #{mnist_mlp_forward.2} parent=0 // pred_region
    _
  $region5: #{mnist_mlp_forward.2} parent=0 // pred_fallthru
    _
  // Predicated region
  $region6: #{mnist_mlp_forward.2} parent=0 // pred_check
    _
  $region7: #{mnist_mlp_forward.2} parent=0 // pred_check_branch
    %15 = sbr.rel (0) target = $region9
  $region8: #{mnist_mlp_forward.2} parent=0 // pred_region
    _
  $region9: #{mnist_mlp_forward.2} parent=0 // pred_fallthru
    _
  // Predicated region
  $region10: #{mnist_mlp_forward.2} parent=0 // pred_check
    _
  $region11: #{mnist_mlp_forward.2} parent=0 // pred_check_branch
    %17 = sbr.rel (0) target = $region13
  $region12: #{mnist_mlp_forward.2} parent=0 // pred_region
    _
  $region13: #{mnist_mlp_forward.2} parent=0 // pred_fallthru
    _
  // Predicated region
  $region14: #{mnist_mlp_forward.2} parent=0 // pred_check
    _
  $region15: #{mnist_mlp_forward.2} parent=0 // pred_check_branch
    %19 = sbr.rel (0) target = $region17
  $region16: #{mnist_mlp_forward.2} parent=0 // pred_region
    _
  $region17: #{mnist_mlp_forward.2} parent=0 // pred_fallthru
    _
  // Predicated region
  $region18: #{mnist_mlp_forward.2} parent=0 // pred_check
    _
  $region19: #{mnist_mlp_forward.2} parent=0 // pred_check_branch
    %21 = sbr.rel (0) target = $region21
  $region20: #{mnist_mlp_forward.2} parent=0 // pred_region
    _
  $region21: #{mnist_mlp_forward.2} parent=0 // pred_fallthru
    _
  // Predicated region
  $region22: #{mnist_mlp_forward.2} parent=0 // pred_check
    _
  $region23: #{mnist_mlp_forward.2} parent=0 // pred_check_branch
    %23 = sbr.rel (0) target = $region25
  $region24: #{mnist_mlp_forward.2} parent=0 // pred_region
    _
  $region25: #{mnist_mlp_forward.2} parent=0 // pred_fallthru
    _
  // Predicated region
  $region26: #{mnist_mlp_forward.2} parent=0 // pred_check
    _
  $region27: #{mnist_mlp_forward.2} parent=0 // pred_check_branch
    %25 = sbr.rel (0) target = $region29
  $region28: #{mnist_mlp_forward.2} parent=0 // pred_region
    _
  $region29: #{mnist_mlp_forward.2} parent=0 // pred_fallthru
    _
  %v27 = vld [vmem:[%s0] sm:$0xff]
  %v28 = vld [vmem:[%s0 + $0x8] sm:$0xff]
  %v29 = vld [vmem:[%s0 + $0x10] sm:$0xff]
  %v30 = vld [vmem:[%s0 + $0x18] sm:$0xf]
  %v31 = vld [vmem:[%s1] sm:$0xf]
  %v32 = vld [vmem:[%s1 + $0x4] sm:$0xf]
  %v33 = vld [vmem:[%s1 + $0x8] sm:$0xf]
  %v34 = vld [vmem:[%s1 + $0xc] sm:$0xf]
  %v35 = vld [vmem:[%s1 + $0x10] sm:$0xf]
  %v36 = vld [vmem:[%s1 + $0x14] sm:$0xf]
  %v37 = vld [vmem:[%s1 + $0x18] sm:$0xf]
  %v38 = vld [vmem:[%s1 + $0x1c] sm:$0xf]
  %v39 = vld [vmem:[%s1 + $0x20] sm:$0xf]
  %v40 = vld [vmem:[%s1 + $0x24] sm:$0xf]
  %v41 = vld [vmem:[%s1 + $0x28] sm:$0xf]
  %v42 = vld [vmem:[%s1 + $0x2c] sm:$0xf]
  %v43 = vld [vmem:[%s1 + $0x30] sm:$0xf]
  %v44 = vld [vmem:[%s1 + $0x34] sm:$0xf]
  %v45 = vld [vmem:[%s1 + $0x38] sm:$0xf]
  %v46 = vld [vmem:[%s1 + $0x3c] sm:$0xf]
  %v47 = vld [vmem:[%s1 + $0x40] sm:$0xf]
  %v48 = vld [vmem:[%s1 + $0x44] sm:$0xf]
  %v49 = vld [vmem:[%s1 + $0x48] sm:$0xf]
  %v50 = vld [vmem:[%s1 + $0x4c] sm:$0xf]
  %v51 = vld [vmem:[%s1 + $0x50] sm:$0xf]
  %v52 = vld [vmem:[%s1 + $0x54] sm:$0xf]
  %v53 = vld [vmem:[%s1 + $0x58] sm:$0xf]
  %v54 = vld [vmem:[%s1 + $0x5c] sm:$0xf]
  %v55 = vld [vmem:[%s1 + $0x60] sm:$0xf]
  %v56 = vld [vmem:[%s1 + $0x64] sm:$0xf]
  %v57 = vld [vmem:[%s1 + $0x68] sm:$0xf]
  %v58 = vld [vmem:[%s1 + $0x6c] sm:$0xf]
  %v59 = vld [vmem:[%s1 + $0x70] sm:$0xf]
  %v60 = vld [vmem:[%s1 + $0x74] sm:$0xf]
  %v61 = vld [vmem:[%s1 + $0x78] sm:$0xf]
  %v62 = vld [vmem:[%s1 + $0x7c] sm:$0xf]
  %v63 = vld [vmem:[%s1 + $0x80] sm:$0xf]
  %v64 = vld [vmem:[%s1 + $0x84] sm:$0xf]
  %v65 = vld [vmem:[%s1 + $0x88] sm:$0xf]
  %v66 = vld [vmem:[%s1 + $0x8c] sm:$0xf]
  %v67 = vld [vmem:[%s1 + $0x90] sm:$0xf]
  %v68 = vld [vmem:[%s1 + $0x94] sm:$0xf]
  %v69 = vld [vmem:[%s1 + $0x98] sm:$0xf]
  %v70 = vld [vmem:[%s1 + $0x9c] sm:$0xf]
  %v71 = vld [vmem:[%s1 + $0xa0] sm:$0xf]
  %v72 = vld [vmem:[%s1 + $0xa4] sm:$0xf]
  %v73 = vld [vmem:[%s1 + $0xa8] sm:$0xf]
  %v74 = vld [vmem:[%s1 + $0xac] sm:$0xf]
  %v75 = vld [vmem:[%s1 + $0xb0] sm:$0xf]
  %v76 = vld [vmem:[%s1 + $0xb4] sm:$0xf]
  %v77 = vld [vmem:[%s1 + $0xb8] sm:$0xf]
  %v78 = vld [vmem:[%s1 + $0xbc] sm:$0xf]
  %v79 = vld [vmem:[%s1 + $0xc0] sm:$0xf]
  %v80 = vld [vmem:[%s1 + $0xc4] sm:$0xf]
  %v81 = vld [vmem:[%s1 + $0xc8] sm:$0xf]
  %v82 = vld [vmem:[%s1 + $0xcc] sm:$0xf]
  %v83 = vld [vmem:[%s1 + $0xd0] sm:$0xf]
  %v84 = vld [vmem:[%s1 + $0xd4] sm:$0xf]
  %v85 = vld [vmem:[%s1 + $0xd8] sm:$0xf]
  %v86 = vld [vmem:[%s1 + $0xdc] sm:$0xf]
  %v87 = vld [vmem:[%s1 + $0xe0] sm:$0xf]
  %v88 = vld [vmem:[%s1 + $0xe4] sm:$0xf]
  %v89 = vld [vmem:[%s1 + $0xe8] sm:$0xf]
  %v90 = vld [vmem:[%s1 + $0xec] sm:$0xf]
  %v91 = vld [vmem:[%s1 + $0xf0] sm:$0xf]
  %v92 = vld [vmem:[%s1 + $0xf4] sm:$0xf]
  %v93 = vld [vmem:[%s1 + $0xf8] sm:$0xf]
  %v94 = vld [vmem:[%s1 + $0xfc] sm:$0xf]
  %v95 = vld [vmem:[%s1 + $0x100] sm:$0xf]
  %v96 = vld [vmem:[%s1 + $0x104] sm:$0xf]
  %v97 = vld [vmem:[%s1 + $0x108] sm:$0xf]
  %v98 = vld [vmem:[%s1 + $0x10c] sm:$0xf]
  %v99 = vld [vmem:[%s1 + $0x110] sm:$0xf]
  %v100 = vld [vmem:[%s1 + $0x114] sm:$0xf]
  %v101 = vld [vmem:[%s1 + $0x118] sm:$0xf]
  %v102 = vld [vmem:[%s1 + $0x11c] sm:$0xf]
  %v103 = vld [vmem:[%s1 + $0x120] sm:$0xf]
  %v104 = vld [vmem:[%s1 + $0x124] sm:$0xf]
  %v105 = vld [vmem:[%s1 + $0x128] sm:$0xf]
  %v106 = vld [vmem:[%s1 + $0x12c] sm:$0xf]
  %v107 = vld [vmem:[%s1 + $0x130] sm:$0xf]
  %v108 = vld [vmem:[%s1 + $0x134] sm:$0xf]
  %v109 = vld [vmem:[%s1 + $0x138] sm:$0xf]
  %v110 = vld [vmem:[%s1 + $0x13c] sm:$0xf]
  %v111 = vld [vmem:[%s1 + $0x140] sm:$0xf]
  %v112 = vld [vmem:[%s1 + $0x144] sm:$0xf]
  %v113 = vld [vmem:[%s1 + $0x148] sm:$0xf]
  %v114 = vld [vmem:[%s1 + $0x14c] sm:$0xf]
  %v115 = vld [vmem:[%s1 + $0x150] sm:$0xf]
  %v116 = vld [vmem:[%s1 + $0x154] sm:$0xf]
  %v117 = vld [vmem:[%s1 + $0x158] sm:$0xf]
  %v118 = vld [vmem:[%s1 + $0x15c] sm:$0xf]
  %v119 = vld [vmem:[%s1 + $0x160] sm:$0xf]
  %v120 = vld [vmem:[%s1 + $0x164] sm:$0xf]
  %v121 = vld [vmem:[%s1 + $0x168] sm:$0xf]
  %v122 = vld [vmem:[%s1 + $0x16c] sm:$0xf]
  %v123 = vld [vmem:[%s1 + $0x170] sm:$0xf]
  %v124 = vld [vmem:[%s1 + $0x174] sm:$0xf]
  %v125 = vld [vmem:[%s1 + $0x178] sm:$0xf]
  %v126 = vld [vmem:[%s1 + $0x17c] sm:$0xf]
  %v127 = vld [vmem:[%s1 + $0x180] sm:$0xf]
  %v128 = vld [vmem:[%s1 + $0x184] sm:$0xf]
  %v129 = vld [vmem:[%s2] sm:$0x1]
  %v131 = vlaneseq
  %v132 = vshrl.u32 %v131, 7
  %v133 = vsub.s32 0, %v132
  %v134 = vrot.slane %v129, %v133
  %v140 = vunpack.c.l.b16 %v27
  %v141 = vunpack.c.h.b16 %v27
  %v142 = vunpack.c.l.b16 %v28
  %v143 = vunpack.c.h.b16 %v28
  %v144 = vunpack.c.l.b16 %v29
  %v145 = vunpack.c.h.b16 %v29
  %v146 = vunpack.c.l.b16 %v30
  %v147 = vpack.c.b16 %v140, %v140
  %v148 = vpack.c.b16 %v141, %v141
  %v149 = vpack.c.b16 %v142, %v142
  %v150 = vpack.c.b16 %v143, %v143
  %v151 = vpack.c.b16 %v144, %v144
  %v152 = vpack.c.b16 %v145, %v145
  %v153 = vpack.c.b16 %v146, %v146
  %v258 = vunpack.c.l.b16 %v31
  %v259 = vunpack.c.l.b16 %v32
  %v260 = vunpack.c.l.b16 %v33
  %v261 = vunpack.c.l.b16 %v34
  %v262 = vunpack.c.l.b16 %v35
  %v263 = vunpack.c.l.b16 %v36
  %v264 = vunpack.c.l.b16 %v37
  %v265 = vunpack.c.l.b16 %v38
  %v266 = vunpack.c.l.b16 %v39
  %v267 = vunpack.c.l.b16 %v40
  %v268 = vunpack.c.l.b16 %v41
  %v269 = vunpack.c.l.b16 %v42
  %v270 = vunpack.c.l.b16 %v43
  %v271 = vunpack.c.l.b16 %v44
  %v272 = vunpack.c.l.b16 %v45
  %v273 = vunpack.c.l.b16 %v46
  %v274 = vunpack.c.l.b16 %v47
  %v275 = vunpack.c.l.b16 %v48
  %v276 = vunpack.c.l.b16 %v49
  %v277 = vunpack.c.l.b16 %v50
  %v278 = vunpack.c.l.b16 %v51
  %v279 = vunpack.c.l.b16 %v52
  %v280 = vunpack.c.l.b16 %v53
  %v281 = vunpack.c.l.b16 %v54
  %v282 = vunpack.c.l.b16 %v55
  %v283 = vunpack.c.l.b16 %v56
  %v284 = vunpack.c.l.b16 %v57
  %v285 = vunpack.c.l.b16 %v58
  %v286 = vunpack.c.l.b16 %v59
  %v287 = vunpack.c.l.b16 %v60
  %v288 = vunpack.c.l.b16 %v61
  %v289 = vunpack.c.l.b16 %v62
  %v290 = vunpack.c.l.b16 %v63
  %v291 = vunpack.c.l.b16 %v64
  %v292 = vunpack.c.l.b16 %v65
  %v293 = vunpack.c.l.b16 %v66
  %v294 = vunpack.c.l.b16 %v67
  %v295 = vunpack.c.l.b16 %v68
  %v296 = vunpack.c.l.b16 %v69
  %v297 = vunpack.c.l.b16 %v70
  %v298 = vunpack.c.l.b16 %v71
  %v299 = vunpack.c.l.b16 %v72
  %v300 = vunpack.c.l.b16 %v73
  %v301 = vunpack.c.l.b16 %v74
  %v302 = vunpack.c.l.b16 %v75
  %v303 = vunpack.c.l.b16 %v76
  %v304 = vunpack.c.l.b16 %v77
  %v305 = vunpack.c.l.b16 %v78
  %v306 = vunpack.c.l.b16 %v79
  %v307 = vunpack.c.l.b16 %v80
  %v308 = vunpack.c.l.b16 %v81
  %v309 = vunpack.c.l.b16 %v82
  %v310 = vunpack.c.l.b16 %v83
  %v311 = vunpack.c.l.b16 %v84
  %v312 = vunpack.c.l.b16 %v85
  %v313 = vunpack.c.l.b16 %v86
  %v314 = vunpack.c.l.b16 %v87
  %v315 = vunpack.c.l.b16 %v88
  %v316 = vunpack.c.l.b16 %v89
  %v317 = vunpack.c.l.b16 %v90
  %v318 = vunpack.c.l.b16 %v91
  %v319 = vunpack.c.l.b16 %v92
  %v320 = vunpack.c.l.b16 %v93
  %v321 = vunpack.c.l.b16 %v94
  %v322 = vunpack.c.l.b16 %v95
  %v323 = vunpack.c.l.b16 %v96
  %v324 = vunpack.c.l.b16 %v97
  %v325 = vunpack.c.l.b16 %v98
  %v326 = vunpack.c.l.b16 %v99
  %v327 = vunpack.c.l.b16 %v100
  %v328 = vunpack.c.l.b16 %v101
  %v329 = vunpack.c.l.b16 %v102
  %v330 = vunpack.c.l.b16 %v103
  %v331 = vunpack.c.l.b16 %v104
  %v332 = vunpack.c.l.b16 %v105
  %v333 = vunpack.c.l.b16 %v106
  %v334 = vunpack.c.l.b16 %v107
  %v335 = vunpack.c.l.b16 %v108
  %v336 = vunpack.c.l.b16 %v109
  %v337 = vunpack.c.l.b16 %v110
  %v338 = vunpack.c.l.b16 %v111
  %v339 = vunpack.c.l.b16 %v112
  %v340 = vunpack.c.l.b16 %v113
  %v341 = vunpack.c.l.b16 %v114
  %v342 = vunpack.c.l.b16 %v115
  %v343 = vunpack.c.l.b16 %v116
  %v344 = vunpack.c.l.b16 %v117
  %v345 = vunpack.c.l.b16 %v118
  %v346 = vunpack.c.l.b16 %v119
  %v347 = vunpack.c.l.b16 %v120
  %v348 = vunpack.c.l.b16 %v121
  %v349 = vunpack.c.l.b16 %v122
  %v350 = vunpack.c.l.b16 %v123
  %v351 = vunpack.c.l.b16 %v124
  %v352 = vunpack.c.l.b16 %v125
  %v353 = vunpack.c.l.b16 %v126
  %v354 = vunpack.c.l.b16 %v127
  %v355 = vunpack.c.l.b16 %v128
  %v356 = vpack.c.b16 %v259, %v258
  %v357 = vpack.c.b16 %v261, %v260
  %v358 = vpack.c.b16 %v263, %v262
  %v359 = vpack.c.b16 %v265, %v264
  %v360 = vpack.c.b16 %v267, %v266
  %v361 = vpack.c.b16 %v269, %v268
  %v362 = vpack.c.b16 %v271, %v270
  %v363 = vpack.c.b16 %v273, %v272
  %v364 = vpack.c.b16 %v275, %v274
  %v365 = vpack.c.b16 %v277, %v276
  %v366 = vpack.c.b16 %v279, %v278
  %v367 = vpack.c.b16 %v281, %v280
  %v368 = vpack.c.b16 %v283, %v282
  %v369 = vpack.c.b16 %v285, %v284
  %v370 = vpack.c.b16 %v287, %v286
  %v371 = vpack.c.b16 %v289, %v288
  %v372 = vpack.c.b16 %v291, %v290
  %v373 = vpack.c.b16 %v293, %v292
  %v374 = vpack.c.b16 %v295, %v294
  %v375 = vpack.c.b16 %v297, %v296
  %v376 = vpack.c.b16 %v299, %v298
  %v377 = vpack.c.b16 %v301, %v300
  %v378 = vpack.c.b16 %v303, %v302
  %v379 = vpack.c.b16 %v305, %v304
  %v380 = vpack.c.b16 %v307, %v306
  %v381 = vpack.c.b16 %v309, %v308
  %v382 = vpack.c.b16 %v311, %v310
  %v383 = vpack.c.b16 %v313, %v312
  %v384 = vpack.c.b16 %v315, %v314
  %v385 = vpack.c.b16 %v317, %v316
  %v386 = vpack.c.b16 %v319, %v318
  %v387 = vpack.c.b16 %v321, %v320
  %v388 = vpack.c.b16 %v323, %v322
  %v389 = vpack.c.b16 %v325, %v324
  %v390 = vpack.c.b16 %v327, %v326
  %v391 = vpack.c.b16 %v329, %v328
  %v392 = vpack.c.b16 %v331, %v330
  %v393 = vpack.c.b16 %v333, %v332
  %v394 = vpack.c.b16 %v335, %v334
  %v395 = vpack.c.b16 %v337, %v336
  %v396 = vpack.c.b16 %v339, %v338
  %v397 = vpack.c.b16 %v341, %v340
  %v398 = vpack.c.b16 %v343, %v342
  %v399 = vpack.c.b16 %v345, %v344
  %v400 = vpack.c.b16 %v347, %v346
  %v401 = vpack.c.b16 %v349, %v348
  %v402 = vpack.c.b16 %v351, %v350
  %v403 = vpack.c.b16 %v353, %v352
  %v404 = vpack.c.b16 %v355, %v354
  %vm454 = vcmask 130048
  %v456 = vsel %vm454, %v153, 0
  %458 = vmatprep.subr.bf16.mxu0 0
  %459 = vmatpush1.bf16.msra.mxu0 %v363
  %460 = vmatprep.subr.bf16.mxu0 0
  %461 = vmatpush1.bf16.msra.mxu0 %v362
  %462 = vmatprep.subr.bf16.mxu0 0
  %463 = vmatpush1.bf16.msra.mxu0 %v361
  %464 = vmatprep.subr.bf16.mxu0 0
  %465 = vmatpush1.bf16.msra.mxu0 %v360
  %466 = vmatprep.subr.bf16.mxu0 0
  %467 = vmatpush1.bf16.msra.mxu0 %v359
  %468 = vmatprep.subr.bf16.mxu0 0
  %469 = vmatpush1.bf16.msra.mxu0 %v358
  %470 = vmatprep.subr.bf16.mxu0 0
  %471 = vmatpush1.bf16.msra.mxu0 %v357
  %472 = vmatprep.subr.bf16.mxu0 0
  %473 = vmatpush1.bf16.msra.mxu0 %v356
  %474 = vmatprep.subr.bf16.mxu0 0
  %475 = vmatpush2.bf16.msra.mxu0 %v371
  %476 = vmatprep.subr.bf16.mxu0 0
  %477 = vmatpush2.bf16.msra.mxu0 %v370
  %478 = vmatprep.subr.bf16.mxu0 0
  %479 = vmatpush2.bf16.msra.mxu0 %v369
  %480 = vmatprep.subr.bf16.mxu0 0
  %481 = vmatpush2.bf16.msra.mxu0 %v368
  %482 = vmatprep.subr.bf16.mxu0 0
  %483 = vmatpush2.bf16.msra.mxu0 %v367
  %484 = vmatprep.subr.bf16.mxu0 0
  %485 = vmatpush2.bf16.msra.mxu0 %v366
  %486 = vmatprep.subr.bf16.mxu0 0
  %487 = vmatpush2.bf16.msra.mxu0 %v365
  %488 = vmatprep.subr.bf16.mxu0 0
  %489 = vmatpush2.bf16.msra.mxu0 %v364
  %490 = vmatprep.mubr.bf16.mxu0 %v148
  %491 = vmatmul.mubr.bf16.gmra.mxu0 %v147
  %v492 = vpop.f32.mrf.mxu0
  %v493 = vadd.f32 %v134, %v492
  %v494 = vpop.f32.mrf.mxu0
  %v495 = vpop.f32.mrf.mxu0
  %v496 = vpop.f32.mrf.mxu0
  %497 = vdwg.mxu0
  %498 = vmatprep.subr.bf16.mxu0 0
  %499 = vmatpush1.bf16.msra.mxu0 %v379
  %500 = vmatprep.subr.bf16.mxu0 0
  %501 = vmatpush1.bf16.msra.mxu0 %v378
  %502 = vmatprep.subr.bf16.mxu0 0
  %503 = vmatpush1.bf16.msra.mxu0 %v377
  %504 = vmatprep.subr.bf16.mxu0 0
  %505 = vmatpush1.bf16.msra.mxu0 %v376
  %506 = vmatprep.subr.bf16.mxu0 0
  %507 = vmatpush1.bf16.msra.mxu0 %v375
  %508 = vmatprep.subr.bf16.mxu0 0
  %509 = vmatpush1.bf16.msra.mxu0 %v374
  %510 = vmatprep.subr.bf16.mxu0 0
  %511 = vmatpush1.bf16.msra.mxu0 %v373
  %512 = vmatprep.subr.bf16.mxu0 0
  %513 = vmatpush1.bf16.msra.mxu0 %v372
  %514 = vmatprep.subr.bf16.mxu0 0
  %515 = vmatpush2.bf16.msra.mxu0 %v387
  %516 = vmatprep.subr.bf16.mxu0 0
  %517 = vmatpush2.bf16.msra.mxu0 %v386
  %518 = vmatprep.subr.bf16.mxu0 0
  %519 = vmatpush2.bf16.msra.mxu0 %v385
  %520 = vmatprep.subr.bf16.mxu0 0
  %521 = vmatpush2.bf16.msra.mxu0 %v384
  %522 = vmatprep.subr.bf16.mxu0 0
  %523 = vmatpush2.bf16.msra.mxu0 %v383
  %524 = vmatprep.subr.bf16.mxu0 0
  %525 = vmatpush2.bf16.msra.mxu0 %v382
  %526 = vmatprep.subr.bf16.mxu0 0
  %527 = vmatpush2.bf16.msra.mxu0 %v381
  %528 = vmatprep.subr.bf16.mxu0 0
  %529 = vmatpush2.bf16.msra.mxu0 %v380
  %530 = vmatprep.mubr.bf16.mxu0 %v150
  %531 = vmatmul.mubr.bf16.gmra.mxu0 %v149
  %v532 = vpop.f32.mrf.mxu0
  %v533 = vadd.f32 %v493, %v532
  %v534 = vpop.f32.mrf.mxu0
  %v535 = vpop.f32.mrf.mxu0
  %v536 = vpop.f32.mrf.mxu0
  %537 = vdwg.mxu0
  %538 = vmatprep.subr.bf16.mxu0 0
  %539 = vmatpush1.bf16.msra.mxu0 %v395
  %540 = vmatprep.subr.bf16.mxu0 0
  %541 = vmatpush1.bf16.msra.mxu0 %v394
  %542 = vmatprep.subr.bf16.mxu0 0
  %543 = vmatpush1.bf16.msra.mxu0 %v393
  %544 = vmatprep.subr.bf16.mxu0 0
  %545 = vmatpush1.bf16.msra.mxu0 %v392
  %546 = vmatprep.subr.bf16.mxu0 0
  %547 = vmatpush1.bf16.msra.mxu0 %v391
  %548 = vmatprep.subr.bf16.mxu0 0
  %549 = vmatpush1.bf16.msra.mxu0 %v390
  %550 = vmatprep.subr.bf16.mxu0 0
  %551 = vmatpush1.bf16.msra.mxu0 %v389
  %552 = vmatprep.subr.bf16.mxu0 0
  %553 = vmatpush1.bf16.msra.mxu0 %v388
  %554 = vmatprep.subr.bf16.mxu0 0
  %555 = vmatpush2.bf16.msra.mxu0 %v403
  %556 = vmatprep.subr.bf16.mxu0 0
  %557 = vmatpush2.bf16.msra.mxu0 %v402
  %558 = vmatprep.subr.bf16.mxu0 0
  %559 = vmatpush2.bf16.msra.mxu0 %v401
  %560 = vmatprep.subr.bf16.mxu0 0
  %561 = vmatpush2.bf16.msra.mxu0 %v400
  %562 = vmatprep.subr.bf16.mxu0 0
  %563 = vmatpush2.bf16.msra.mxu0 %v399
  %564 = vmatprep.subr.bf16.mxu0 0
  %565 = vmatpush2.bf16.msra.mxu0 %v398
  %566 = vmatprep.subr.bf16.mxu0 0
  %567 = vmatpush2.bf16.msra.mxu0 %v397
  %568 = vmatprep.subr.bf16.mxu0 0
  %569 = vmatpush2.bf16.msra.mxu0 %v396
  %570 = vmatprep.mubr.bf16.mxu0 %v152
  %571 = vmatmul.mubr.bf16.gmra.mxu0 %v151
  %v572 = vpop.f32.mrf.mxu0
  %v573 = vadd.f32 %v533, %v572
  %v574 = vpop.f32.mrf.mxu0
  %v575 = vpop.f32.mrf.mxu0
  %v576 = vpop.f32.mrf.mxu0
  %577 = vdwg.mxu0
  %578 = vmatprep.subr.bf16.mxu0 0
  %579 = vmatpush1.bf16.msra.mxu0 0
  %580 = vmatprep.subr.bf16.mxu0 0
  %581 = vmatpush1.bf16.msra.mxu0 0
  %582 = vmatprep.subr.bf16.mxu0 0
  %583 = vmatpush1.bf16.msra.mxu0 0
  %584 = vmatprep.subr.bf16.mxu0 0
  %585 = vmatpush1.bf16.msra.mxu0 0
  %586 = vmatprep.subr.bf16.mxu0 0
  %587 = vmatpush1.bf16.msra.mxu0 0
  %588 = vmatprep.subr.bf16.mxu0 0
  %589 = vmatpush1.bf16.msra.mxu0 0
  %590 = vmatprep.subr.bf16.mxu0 0
  %591 = vmatpush1.bf16.msra.mxu0 0
  %592 = vmatprep.subr.bf16.mxu0 0
  %593 = vmatpush1.bf16.msra.mxu0 %v404
  %594 = vmatprep.subr.bf16.mxu0 0
  %595 = vmatpush2.bf16.msra.mxu0 0
  %596 = vmatprep.subr.bf16.mxu0 0
  %597 = vmatpush2.bf16.msra.mxu0 0
  %598 = vmatprep.subr.bf16.mxu0 0
  %599 = vmatpush2.bf16.msra.mxu0 0
  %600 = vmatprep.subr.bf16.mxu0 0
  %601 = vmatpush2.bf16.msra.mxu0 0
  %602 = vmatprep.subr.bf16.mxu0 0
  %603 = vmatpush2.bf16.msra.mxu0 0
  %604 = vmatprep.subr.bf16.mxu0 0
  %605 = vmatpush2.bf16.msra.mxu0 0
  %606 = vmatprep.subr.bf16.mxu0 0
  %607 = vmatpush2.bf16.msra.mxu0 0
  %608 = vmatprep.subr.bf16.mxu0 0
  %609 = vmatpush2.bf16.msra.mxu0 0
  %610 = vmatprep.mubr.bf16.mxu0 0
  %611 = vmatmul.mubr.bf16.gmra.mxu0 %v456
  %v612 = vpop.f32.mrf.mxu0
  %v613 = vadd.f32 %v573, %v612
  %v614 = vpop.f32.mrf.mxu0
  %v615 = vpop.f32.mrf.mxu0
  %v616 = vpop.f32.mrf.mxu0
  %617 = vdwg.mxu0
  %v618 = vsub.f32 0.0, %v613
  %v619 = vmul.f32 %v618, 1.442695
  %v620 = vpow.pop %v619
  %v621 = vadd.f32 %v620, 1.0
  %v622 = vrcp.pop %v621
  %v623 = vpack.c.bf16 %v622, %v622
  %v624 = vld [vmem:[%s3] sm:$0xf]
  %v625 = vld [vmem:[%s3 + $0x4] sm:$0xf]
  %v626 = vld [vmem:[%s3 + $0x8] sm:$0xf]
  %v627 = vld [vmem:[%s3 + $0xc] sm:$0xf]
  %v628 = vld [vmem:[%s3 + $0x10] sm:$0xf]
  %v629 = vld [vmem:[%s3 + $0x14] sm:$0xf]
  %v630 = vld [vmem:[%s3 + $0x18] sm:$0xf]
  %v631 = vld [vmem:[%s3 + $0x1c] sm:$0xf]
  %v632 = vld [vmem:[%s4] sm:$0x1]
  %v634 = vlaneseq
  %v635 = vshrl.u32 %v634, 7
  %v636 = vsub.s32 0, %v635
  %v637 = vrot.slane %v632, %v636
  %v647 = vunpack.c.l.b16 %v624
  %v648 = vunpack.c.l.b16 %v625
  %v649 = vunpack.c.l.b16 %v626
  %v650 = vunpack.c.l.b16 %v627
  %v651 = vunpack.c.l.b16 %v628
  %v652 = vunpack.c.l.b16 %v629
  %v653 = vunpack.c.l.b16 %v630
  %v654 = vunpack.c.l.b16 %v631
  %v655 = vpack.c.b16 %v648, %v647
  %v656 = vpack.c.b16 %v650, %v649
  %v657 = vpack.c.b16 %v652, %v651
  %v658 = vpack.c.b16 %v654, %v653
  %vm663 = vcmask 523264
  %v665 = vsel %vm663, %v623, 0
  %667 = vmatprep.subr.bf16.mxu0 0
  %668 = vmatpush1.bf16.msra.mxu0 0
  %669 = vmatprep.subr.bf16.mxu0 0
  %670 = vmatpush1.bf16.msra.mxu0 0
  %671 = vmatprep.subr.bf16.mxu0 0
  %672 = vmatpush1.bf16.msra.mxu0 0
  %673 = vmatprep.subr.bf16.mxu0 0
  %674 = vmatpush1.bf16.msra.mxu0 0
  %675 = vmatprep.subr.bf16.mxu0 0
  %676 = vmatpush1.bf16.msra.mxu0 %v658
  %677 = vmatprep.subr.bf16.mxu0 0
  %678 = vmatpush1.bf16.msra.mxu0 %v657
  %679 = vmatprep.subr.bf16.mxu0 0
  %680 = vmatpush1.bf16.msra.mxu0 %v656
  %681 = vmatprep.subr.bf16.mxu0 0
  %682 = vmatpush1.bf16.msra.mxu0 %v655
  %683 = vmatprep.subr.bf16.mxu0 0
  %684 = vmatpush2.bf16.msra.mxu0 0
  %685 = vmatprep.subr.bf16.mxu0 0
  %686 = vmatpush2.bf16.msra.mxu0 0
  %687 = vmatprep.subr.bf16.mxu0 0
  %688 = vmatpush2.bf16.msra.mxu0 0
  %689 = vmatprep.subr.bf16.mxu0 0
  %690 = vmatpush2.bf16.msra.mxu0 0
  %691 = vmatprep.subr.bf16.mxu0 0
  %692 = vmatpush2.bf16.msra.mxu0 0
  %693 = vmatprep.subr.bf16.mxu0 0
  %694 = vmatpush2.bf16.msra.mxu0 0
  %695 = vmatprep.subr.bf16.mxu0 0
  %696 = vmatpush2.bf16.msra.mxu0 0
  %697 = vmatprep.subr.bf16.mxu0 0
  %698 = vmatpush2.bf16.msra.mxu0 0
  %699 = vmatprep.mubr.bf16.mxu0 0
  %700 = vmatmul.mubr.bf16.gmra.mxu0 %v665
  %v701 = vpop.f32.mrf.mxu0
  %v702 = vadd.f32 %v637, %v701
  %v703 = vpop.f32.mrf.mxu0
  %v704 = vpop.f32.mrf.mxu0
  %v705 = vpop.f32.mrf.mxu0
  %706 = vdwg.mxu0
  %v707 = vsub.f32 0.0, %v702
  %v708 = vmul.f32 %v707, 1.442695
  %v709 = vpow.pop %v708
  %v710 = vadd.f32 %v709, 1.0
  %v711 = vrcp.pop %v710
  %v712 = vpack.c.bf16 %v711, %v711
  %v713 = vld [vmem:[%s5] sm:$0xf]
  %v714 = vld [vmem:[%s5 + $0x4] sm:$0xf]
  %v715 = vld [vmem:[%s5 + $0x8] sm:$0xf]
  %v716 = vld [vmem:[%s5 + $0xc] sm:$0x7]
  %v717 = vld [vmem:[%s6] sm:$0x1]
  %v719 = vlaneseq
  %v720 = vshrl.u32 %v719, 7
  %v721 = vsub.s32 0, %v720
  %v722 = vrot.slane %v717, %v721
  %v728 = vunpack.c.l.b16 %v713
  %v729 = vunpack.c.l.b16 %v714
  %v730 = vunpack.c.l.b16 %v715
  %v731 = vunpack.c.l.b16 %v716
  %v732 = vpack.c.b16 %v729, %v728
  %v733 = vpack.c.b16 %v731, %v730
  %vm735 = vcmask 244736
  %v737 = vsel %vm735, %v712, 0
  %vm739 = vcmask 1046528
  %v741 = vsel %vm739, %v733, 0
  %743 = vmatprep.subr.bf16.mxu0 0
  %744 = vmatpush1.bf16.msra.mxu0 0
  %745 = vmatprep.subr.bf16.mxu0 0
  %746 = vmatpush1.bf16.msra.mxu0 0
  %747 = vmatprep.subr.bf16.mxu0 0
  %748 = vmatpush1.bf16.msra.mxu0 0
  %749 = vmatprep.subr.bf16.mxu0 0
  %750 = vmatpush1.bf16.msra.mxu0 0
  %751 = vmatprep.subr.bf16.mxu0 0
  %752 = vmatpush1.bf16.msra.mxu0 0
  %753 = vmatprep.subr.bf16.mxu0 0
  %754 = vmatpush1.bf16.msra.mxu0 0
  %755 = vmatprep.subr.bf16.mxu0 0
  %756 = vmatpush1.bf16.msra.mxu0 %v741
  %757 = vmatprep.subr.bf16.mxu0 0
  %758 = vmatpush1.bf16.msra.mxu0 %v732
  %759 = vmatprep.subr.bf16.mxu0 0
  %760 = vmatpush2.bf16.msra.mxu0 0
  %761 = vmatprep.subr.bf16.mxu0 0
  %762 = vmatpush2.bf16.msra.mxu0 0
  %763 = vmatprep.subr.bf16.mxu0 0
  %764 = vmatpush2.bf16.msra.mxu0 0
  %765 = vmatprep.subr.bf16.mxu0 0
  %766 = vmatpush2.bf16.msra.mxu0 0
  %767 = vmatprep.subr.bf16.mxu0 0
  %768 = vmatpush2.bf16.msra.mxu0 0
  %769 = vmatprep.subr.bf16.mxu0 0
  %770 = vmatpush2.bf16.msra.mxu0 0
  %771 = vmatprep.subr.bf16.mxu0 0
  %772 = vmatpush2.bf16.msra.mxu0 0
  %773 = vmatprep.subr.bf16.mxu0 0
  %774 = vmatpush2.bf16.msra.mxu0 0
  %775 = vmatprep.mubr.bf16.mxu0 0
  %776 = vmatmul.mubr.bf16.gmra.mxu0 %v737
  %v777 = vpop.f32.mrf.mxu0
  %v778 = vadd.f32 %v722, %v777
  %v779 = vpop.f32.mrf.mxu0
  %v780 = vpop.f32.mrf.mxu0
  %v781 = vpop.f32.mrf.mxu0
  %782 = vdwg.mxu0
  %783 = vst [vmem:[%s7] sm:$0xff] %v778
  // Predicated region
  $region30: #{mnist_mlp_forward.2} parent=0 // pred_check
    _
  $region31: #{mnist_mlp_forward.2} parent=0 // pred_check_branch
    %785 = sbr.rel (0) target = $region33
  $region32: #{mnist_mlp_forward.2} parent=0 // pred_region
    _
  $region33: #{mnist_mlp_forward.2} parent=0 // pred_fallthru
    _
  // Predicated region
  $region34: #{mnist_mlp_forward.2} parent=0 // pred_check
    _
  $region35: #{mnist_mlp_forward.2} parent=0 // pred_check_branch
    %787 = sbr.rel (0) target = $region37
  $region36: #{mnist_mlp_forward.2} parent=0 // pred_region
    _
  $region37: #{mnist_mlp_forward.2} parent=0 // pred_fallthru
    _

</llo_original>
